<compile_context>
chip_gen: v5e
topology: v5e:2x2
jax: 0.10.0
libtpu: 0.0.40
codegen_flags: <defaults>
</compile_context>

<pallas_src>
import functools

import jax
import jax.numpy as jnp
from jax.experimental import pallas as pl
from jax.experimental.pallas import tpu as pltpu


# --------------------------------------------------------------------------------------
# Kernels
# --------------------------------------------------------------------------------------

def scse_fused_kernel(x_ref, w1_ref, b1_ref, w2_ref, b2_ref, ws_ref, bs_ref, o_ref, *, inv_hw):
    """Single pass per n: pooled mean -> squeeze MLP -> spatial gate -> fused multiply."""
    x = x_ref[...]                                                   # (1, C, HW), I/O dtype
    xf = x[0]                                                        # (C, HW)

    # --- cSE: global average pool (f32 accumulation), 1x1 conv -> ReLU -> 1x1 conv -> sigmoid.
    # Everything stays column-shaped ((C,1)/(mid,1)) so no relayout is ever needed.
    pooled = jnp.sum(xf.astype(jnp.float32), axis=1, keepdims=True) * inv_hw          # (C, 1)
    h = jnp.dot(w1_ref[...], pooled, preferred_element_type=jnp.float32) + b1_ref[...]  # (mid, 1)
    h = jnp.maximum(h, 0.0)
    cgate = jax.nn.sigmoid(
        jnp.dot(w2_ref[...], h, preferred_element_type=jnp.float32) + b2_ref[...])      # (C, 1)

    # --- sSE: 1x1 conv over channels -> sigmoid (x fed to the MXU in its native dtype).
    s = jnp.dot(ws_ref[...], xf, preferred_element_type=jnp.float32) + bs_ref[0, 0]     # (1, HW)
    sgate = jax.nn.sigmoid(s)

    # --- fused gate, cast down once, single full-tile multiply in the I/O dtype.
    gate = (cgate.astype(x.dtype)[None, :, :] + sgate.astype(x.dtype)[None, :, :])      # (1, C, HW)
    o_ref[...] = x * gate


def cse_gate_kernel(x_ref, w1_ref, b1_ref, w2_ref, b2_ref, g_ref, acc_ref, *, hw, inv_hw):
    """Two-pass path, pass 1: accumulate the spatial sum over HW tiles; run the MLP at the last."""
    k = pl.program_id(1)

    @pl.when(k == 0)
    def _():
        acc_ref[...] = jnp.zeros_like(acc_ref)

    xf = x_ref[0].astype(jnp.float32)                                # (C, T)
    t = xf.shape[1]
    if hw % t != 0:
        # Tail tile is partial: input reads are NOT auto-masked, so zero the invalid lanes.
        valid = hw - k * t
        lane = jax.lax.broadcasted_iota(jnp.int32, xf.shape, 1)
        xf = jnp.where(lane < valid, xf, 0.0)

    # Natural layout for a lane reduction: C stays on sublanes, no per-tile relayout.
    acc_ref[...] += jnp.sum(xf, axis=1, keepdims=True)               # (C, 1)

    @pl.when(k == pl.num_programs(1) - 1)
    def _():
        pooled = acc_ref[...] * inv_hw                                                   # (C, 1)
        h = jnp.dot(w1_ref[...], pooled, preferred_element_type=jnp.float32) + b1_ref[...]  # (mid, 1)
        h = jnp.maximum(h, 0.0)
        g = jax.nn.sigmoid(
            jnp.dot(w2_ref[...], h, preferred_element_type=jnp.float32) + b2_ref[...])      # (C, 1)
        g_ref[...] = g[None, :, :]                                                       # (1, C, 1)


def scse_apply_kernel(x_ref, g_ref, ws_ref, bs_ref, o_ref):
    """Two-pass path, pass 2: sgate for this HW tile, then out = x * (cgate + sgate)."""
    x = x_ref[...]                                                   # (1, C, T), I/O dtype
    s = jnp.dot(ws_ref[...], x[0], preferred_element_type=jnp.float32) + bs_ref[0, 0]   # (1, T)
    sgate = jax.nn.sigmoid(s)
    gate = (g_ref[...] + sgate[:, None, :]).astype(x.dtype)          # (1,C,1)+(1,1,T) -> (1,C,T)
    o_ref[...] = x * gate                                            # single fused multiply


# --------------------------------------------------------------------------------------
# Wrapper
# --------------------------------------------------------------------------------------

def _tpu_budgets():
    """Per-generation VMEM budgets (bytes).  v7x has only 64 MiB physical VMEM."""
    try:
        info_fn = getattr(pltpu, "get_tpu_info", None)
        vmem_cap = info_fn().vmem_capacity_bytes if info_fn is not None else 64 * 1024 * 1024
    except Exception:  # no TPU / API mismatch -> be conservative (v7x-sized)
        vmem_cap = 64 * 1024 * 1024
    if vmem_cap <= 96 * 1024 * 1024:          # v7x-like
        return {"vmem_limit": 48 << 20, "block_bytes": 4 << 20, "fused_slab": 6 << 20}
    return {"vmem_limit": 96 << 20, "block_bytes": 8 << 20, "fused_slab": 12 << 20}     # v5e/v6e


def _choose_hw_tile(hw, c_pad, elem_bytes, block_bytes):
    """Largest lane-dense tile (multiple of 128) under block_bytes; no divisibility rule."""
    hw_pad = -(-hw // 128) * 128
    cap = max(128, (block_bytes // max(1, c_pad * elem_bytes)) // 128 * 128)
    return min(hw_pad, cap)


def scse_forward(x_nchw, w1, b1, w2, b2, ws, bs, *,
                 max_fused_slab_bytes=None, max_block_bytes=None):
    """SCSE forward.  x_nchw: (N, C, H, W), f32 or bf16 (accumulation in f32).
    Weights in PyTorch 1x1-conv layout: w1 (mid,C,1,1), w2 (C,mid,1,1), ws (1,C,1,1)."""
    N, C, H, W = x_nchw.shape
    HW = H * W
    mid = w1.shape[0]
    io_dtype = x_nchw.dtype
    itemsize = jnp.dtype(io_dtype).itemsize

    budgets = _tpu_budgets()
    vmem_limit = budgets["vmem_limit"]
    fused_slab_budget = budgets["fused_slab"] if max_fused_slab_bytes is None else max_fused_slab_bytes
    block_bytes = budgets["block_bytes"] if max_block_bytes is None else max_block_bytes

    x = x_nchw.reshape(N, C, HW)                                     # free (contiguous)

    # 1x1-conv weights as matmul-ready operands (column layout: no transposes in-kernel).
    w1m = jnp.squeeze(w1, (2, 3)).astype(jnp.float32)                # (mid, C)
    w2m = jnp.squeeze(w2, (2, 3)).astype(jnp.float32)                # (C, mid)
    wsm = jnp.squeeze(ws, (2, 3)).astype(io_dtype)                   # (1, C), native dtype for MXU
    b1m = b1.reshape(mid, 1).astype(jnp.float32)
    b2m = b2.reshape(C, 1).astype(jnp.float32)
    bsm = bs.reshape(1, 1).astype(jnp.float32)                       # scalar -> SMEM

    # VMEM footprint of one n-slab (sublane/lane padded).
    c_sub = 8 if itemsize >= 4 else 16
    c_pad = -(-C // c_sub) * c_sub
    hw_pad = -(-HW // 128) * 128
    slab_bytes = c_pad * hw_pad * itemsize

    # -------------------- fused single-pass path: 1R + 1W of x --------------------
    if slab_bytes <= fused_slab_budget:
        out = pl.pallas_call(
            functools.partial(scse_fused_kernel, inv_hw=1.0 / HW),
            out_shape=jax.ShapeDtypeStruct((N, C, HW), io_dtype),
            grid=(N,),
            in_specs=[
                pl.BlockSpec((1, C, HW), lambda n: (n, 0, 0)),
                pl.BlockSpec((mid, C), lambda n: (0, 0)),
                pl.BlockSpec((mid, 1), lambda n: (0, 0)),
                pl.BlockSpec((C, mid), lambda n: (0, 0)),
                pl.BlockSpec((C, 1), lambda n: (0, 0)),
                pl.BlockSpec((1, C), lambda n: (0, 0)),
                pl.BlockSpec(memory_space=pltpu.MemorySpace.SMEM),
            ],
            out_specs=pl.BlockSpec((1, C, HW), lambda n: (n, 0, 0)),
            compiler_params=pltpu.CompilerParams(
                dimension_semantics=("parallel",),
                vmem_limit_bytes=vmem_limit),
        )(x, w1m, b1m, w2m, b2m, wsm, bsm)
        return out.reshape(N, C, H, W)

    # -------------------- two-pass fallback: 2R + 1W of x --------------------
    T = _choose_hw_tile(HW, c_pad, itemsize, block_bytes)
    n_hw = pl.cdiv(HW, T)

    # Pass 1: channel gate cgate (N, C, 1).
    cgate = pl.pallas_call(
        functools.partial(cse_gate_kernel, hw=HW, inv_hw=1.0 / HW),
        out_shape=jax.ShapeDtypeStruct((N, C, 1), jnp.float32),
        grid=(N, n_hw),
        in_specs=[
            pl.BlockSpec((1, C, T), lambda n, k: (n, 0, k)),
            pl.BlockSpec((mid, C), lambda n, k: (0, 0)),
            pl.BlockSpec((mid, 1), lambda n, k: (0, 0)),
            pl.BlockSpec((C, mid), lambda n, k: (0, 0)),
            pl.BlockSpec((C, 1), lambda n, k: (0, 0)),
        ],
        out_specs=pl.BlockSpec((1, C, 1), lambda n, k: (n, 0, 0)),
        scratch_shapes=[pltpu.VMEM((C, 1), jnp.float32)],
        compiler_params=pltpu.CompilerParams(
            dimension_semantics=("parallel", "arbitrary"),
            vmem_limit_bytes=vmem_limit),
    )(x, w1m, b1m, w2m, b2m)

    # Pass 2: spatial gate + fused combine, tiled over (N, HW); partial tail stores are
    # masked by Pallas, so no padding / slicing of x in HBM is ever needed.
    out = pl.pallas_call(
        scse_apply_kernel,
        out_shape=jax.ShapeDtypeStruct((N, C, HW), io_dtype),
        grid=(N, n_hw),
        in_specs=[
            pl.BlockSpec((1, C, T), lambda n, k: (n, 0, k)),
            pl.BlockSpec((1, C, 1), lambda n, k: (n, 0, 0)),
            pl.BlockSpec((1, C), lambda n, k: (0, 0)),
            pl.BlockSpec(memory_space=pltpu.MemorySpace.SMEM),
        ],
        out_specs=pl.BlockSpec((1, C, T), lambda n, k: (n, 0, k)),
        compiler_params=pltpu.CompilerParams(
            dimension_semantics=("parallel", "parallel"),
            vmem_limit_bytes=vmem_limit),
    )(x, cgate, wsm, bsm)

    return out.reshape(N, C, H, W)


# --------------------------------------------------------------------------------------
# Reference + self-test
# --------------------------------------------------------------------------------------

def scse_reference(x, w1, b1, w2, b2, ws, bs):
    """Pure-JAX reference mirroring the PyTorch module (f32 math)."""
    xf = x.astype(jnp.float32)
    pooled = jnp.mean(xf, axis=(2, 3))                                   # (N, C)
    h = jnp.maximum(pooled @ jnp.squeeze(w1, (2, 3)).T + b1, 0.0)        # (N, mid)
    cgate = jax.nn.sigmoid(h @ jnp.squeeze(w2, (2, 3)).T + b2)           # (N, C)
    s = jnp.einsum("oc,nchw->nohw", jnp.squeeze(ws, (2, 3)), xf) + bs.reshape(1, 1, 1, 1)
    sgate = jax.nn.sigmoid(s)                                            # (N, 1, H, W)
    return xf * cgate[:, :, None, None] + xf * sgate


if __name__ == "__main__":
    def make_params(key, C, mid):
        k1, k2, k3, k4, k5, k6 = jax.random.split(key, 6)
        w1 = 0.1 * jax.random.normal(k1, (mid, C, 1, 1), dtype=jnp.float32)
        b1 = 0.1 * jax.random.normal(k2, (mid,), dtype=jnp.float32)
        w2 = 0.1 * jax.random.normal(k3, (C, mid, 1, 1), dtype=jnp.float32)
        b2 = 0.1 * jax.random.normal(k4, (C,), dtype=jnp.float32)
        ws = 0.1 * jax.random.normal(k5, (1, C, 1, 1), dtype=jnp.float32)
        bs = 0.1 * jax.random.normal(k6, (1,), dtype=jnp.float32)
        return w1, b1, w2, b2, ws, bs

    key = jax.random.PRNGKey(0)
    reduction = 16
    N, C = 2, 32
    mid = C // reduction
    kx, kp = jax.random.split(key)
    params = make_params(kp, C, mid)

    # Case 1: fused single-pass path, f32, H*W multiple of 128.
    x = jax.random.normal(kx, (N, C, 16, 16), dtype=jnp.float32)
    out = jax.block_until_ready(scse_forward(x, *params))
    ref = scse_reference(x, *params)
    assert out.shape == x.shape
    assert jnp.allclose(out, ref, atol=1e-5, rtol=1e-5), float(jnp.max(jnp.abs(out - ref)))

    # Case 2: fused path with ragged H*W (14*14 = 196, not a multiple of 128).
    x2 = jax.random.normal(jax.random.fold_in(kx, 1), (N, C, 14, 14), dtype=jnp.float32)
    out2 = jax.block_until_ready(scse_forward(x2, *params))
    ref2 = scse_reference(x2, *params)
    assert out2.shape == x2.shape
    assert jnp.allclose(out2, ref2, atol=1e-5, rtol=1e-5), float(jnp.max(jnp.abs(out2 - ref2)))

    # Case 3: forced two-pass path with a tiny tile (exercises accumulation over multiple
    # HW tiles, the iota-masked partial tail read in pass 1, and masked tail stores in pass 2).
    out3 = jax.block_until_ready(
        scse_forward(x2, *params, max_fused_slab_bytes=0, max_block_bytes=C * 128 * 4))
    assert jnp.allclose(out3, ref2, atol=1e-5, rtol=1e-5), float(jnp.max(jnp.abs(out3 - ref2)))

    # Case 4: bf16 I/O (halved HBM traffic; reductions / MLP still accumulate in f32).
    x_bf = x.astype(jnp.bfloat16)
    out4 = jax.block_until_ready(scse_forward(x_bf, *params))
    ref4 = scse_reference(x_bf, *params)
    assert out4.dtype == jnp.bfloat16
    assert jnp.allclose(out4.astype(jnp.float32), ref4, atol=5e-2, rtol=5e-2), \
        float(jnp.max(jnp.abs(out4.astype(jnp.float32) - ref4)))

    print("KERNEL_OK")
</pallas_src>

<mosaic_0001>
module attributes {stable_mosaic.version = 11 : i64} {
  func.func @scse_fused_kernel(%arg0: i32, %arg1: memref<1x32x256xf32, #tpu.memory_space<vmem>>, %arg2: memref<2x32xf32, #tpu.memory_space<vmem>>, %arg3: memref<2x1xf32, #tpu.memory_space<vmem>>, %arg4: memref<32x2xf32, #tpu.memory_space<vmem>>, %arg5: memref<32x1xf32, #tpu.memory_space<vmem>>, %arg6: memref<1x32xf32, #tpu.memory_space<vmem>>, %arg7: memref<1x1xf32, #tpu.memory_space<smem>>, %arg8: memref<1x32x256xf32, #tpu.memory_space<vmem>>) attributes {dimension_semantics = [#tpu.dimension_semantics<parallel>], iteration_bounds = array<i64: 2>, scalar_prefetch = 0 : i64, scratch_operands = 0 : i64, tpu.core_type = #tpu.core_type<tc>, window_params = [{transform_indices = @transform_0, window_bounds = array<i64: 1, 32, 256>}, {pipeline_mode = #tpu.pipeline_mode<synchronous>, transform_indices = @transform_1, window_bounds = array<i64: 2, 32>}, {pipeline_mode = #tpu.pipeline_mode<synchronous>, transform_indices = @transform_2, window_bounds = array<i64: 2, 1>}, {pipeline_mode = #tpu.pipeline_mode<synchronous>, transform_indices = @transform_3, window_bounds = array<i64: 32, 2>}, {pipeline_mode = #tpu.pipeline_mode<synchronous>, transform_indices = @transform_4, window_bounds = array<i64: 32, 1>}, {pipeline_mode = #tpu.pipeline_mode<synchronous>, transform_indices = @transform_5, window_bounds = array<i64: 1, 32>}, {transform_indices = @transform_6, window_bounds = array<i64: 1, 1>}, {transform_indices = @transform_7, window_bounds = array<i64: 1, 32, 256>}]} {
    %c0 = arith.constant 0 : index
    %c0_0 = arith.constant 0 : index
    %c0_1 = arith.constant 0 : index
    %0 = vector.load %arg1[%c0, %c0_0, %c0_1] : memref<1x32x256xf32, #tpu.memory_space<vmem>>, vector<1x32x256xf32>
    %1 = vector.shape_cast %0 : vector<1x32x256xf32> to vector<32x256xf32>
    %cst = arith.constant dense<0.000000e+00> : vector<32xf32>
    %2 = vector.multi_reduction <add>, %1, %cst [1] : vector<32x256xf32> to vector<32xf32>
    %3 = vector.shape_cast %2 : vector<32xf32> to vector<32x1xf32>
    %cst_2 = arith.constant 3.906250e-03 : f32
    %4 = vector.broadcast %cst_2 : f32 to vector<32x1xf32>
    %5 = arith.mulf %3, %4 : vector<32x1xf32>
    %c0_3 = arith.constant 0 : index
    %c0_4 = arith.constant 0 : index
    %6 = vector.load %arg2[%c0_3, %c0_4] : memref<2x32xf32, #tpu.memory_space<vmem>>, vector<2x32xf32>
    %cst_5 = arith.constant dense<0.000000e+00> : vector<2x1xf32>
    %7 = tpu.matmul %6, %5, %cst_5 {dimension_numbers = #tpu.dot_dimension_numbers<[1], [0], [0], [1], [0, 0, 1, 1], [], []>} : vector<2x32xf32>, vector<32x1xf32>, vector<2x1xf32> -> vector<2x1xf32>
    %c0_6 = arith.constant 0 : index
    %c0_7 = arith.constant 0 : index
    %8 = vector.load %arg3[%c0_6, %c0_7] : memref<2x1xf32, #tpu.memory_space<vmem>>, vector<2x1xf32>
    %9 = arith.addf %7, %8 : vector<2x1xf32>
    %cst_8 = arith.constant 0.000000e+00 : f32
    %10 = vector.broadcast %cst_8 : f32 to vector<2x1xf32>
    %11 = arith.maximumf %9, %10 : vector<2x1xf32>
    %c0_9 = arith.constant 0 : index
    %c0_10 = arith.constant 0 : index
    %12 = vector.load %arg4[%c0_9, %c0_10] : memref<32x2xf32, #tpu.memory_space<vmem>>, vector<32x2xf32>
    %cst_11 = arith.constant dense<0.000000e+00> : vector<32x1xf32>
    %13 = tpu.matmul %12, %11, %cst_11 {dimension_numbers = #tpu.dot_dimension_numbers<[1], [0], [0], [1], [0, 0, 1, 1], [], []>} : vector<32x2xf32>, vector<2x1xf32>, vector<32x1xf32> -> vector<32x1xf32>
    %c0_12 = arith.constant 0 : index
    %c0_13 = arith.constant 0 : index
    %14 = vector.load %arg5[%c0_12, %c0_13] : memref<32x1xf32, #tpu.memory_space<vmem>>, vector<32x1xf32>
    %15 = arith.addf %13, %14 : vector<32x1xf32>
    %16 = arith.negf %15 : vector<32x1xf32>
    %17 = math.exp %16 : vector<32x1xf32>
    %cst_14 = arith.constant 1.000000e+00 : f32
    %18 = vector.broadcast %cst_14 : f32 to vector<32x1xf32>
    %19 = arith.addf %18, %17 : vector<32x1xf32>
    %20 = arith.divf %18, %19 : vector<32x1xf32>
    %c0_15 = arith.constant 0 : index
    %c0_16 = arith.constant 0 : index
    %21 = vector.load %arg6[%c0_15, %c0_16] : memref<1x32xf32, #tpu.memory_space<vmem>>, vector<1x32xf32>
    %cst_17 = arith.constant dense<0.000000e+00> : vector<1x256xf32>
    %22 = tpu.matmul %21, %1, %cst_17 {dimension_numbers = #tpu.dot_dimension_numbers<[1], [0], [0], [1], [0, 0, 1, 1], [], []>} : vector<1x32xf32>, vector<32x256xf32>, vector<1x256xf32> -> vector<1x256xf32>
    %c0_18 = arith.constant 0 : index
    %c0_19 = arith.constant 0 : index
    %23 = memref.load %arg7[%c0_18, %c0_19] : memref<1x1xf32, #tpu.memory_space<smem>>
    %24 = vector.broadcast %23 : f32 to vector<1x256xf32>
    %25 = arith.addf %22, %24 : vector<1x256xf32>
    %26 = arith.negf %25 : vector<1x256xf32>
    %27 = math.exp %26 : vector<1x256xf32>
    %cst_20 = arith.constant 1.000000e+00 : f32
    %28 = vector.broadcast %cst_20 : f32 to vector<1x256xf32>
    %29 = arith.addf %28, %27 : vector<1x256xf32>
    %30 = arith.divf %28, %29 : vector<1x256xf32>
    %31 = vector.shape_cast %20 : vector<32x1xf32> to vector<1x32x1xf32>
    %32 = vector.shape_cast %30 : vector<1x256xf32> to vector<1x1x256xf32>
    %33 = vector.broadcast %31 : vector<1x32x1xf32> to vector<1x32x256xf32>
    %34 = vector.broadcast %32 : vector<1x1x256xf32> to vector<1x32x256xf32>
    %35 = arith.addf %33, %34 : vector<1x32x256xf32>
    %36 = arith.mulf %0, %35 : vector<1x32x256xf32>
    %c0_21 = arith.constant 0 : index
    %c0_22 = arith.constant 0 : index
    %c0_23 = arith.constant 0 : index
    %37 = vector.load %arg8[%c0_21, %c0_22, %c0_23] : memref<1x32x256xf32, #tpu.memory_space<vmem>>, vector<1x32x256xf32>
    tpu.vector_store %arg8[%c0_21, %c0_22, %c0_23], %36 {strides = array<i32>} : memref<1x32x256xf32, #tpu.memory_space<vmem>>, vector<1x32x256xf32>,
    return
  }
  func.func @transform_0(%arg0: i32) -> (i32, i32, i32) {
    %c0_i32 = arith.constant 0 : i32
    %c0_i32_0 = arith.constant 0 : i32
    %c0_i32_1 = arith.constant 0 : i32
    return %arg0, %c0_i32, %c0_i32_0 : i32, i32, i32
  }
  func.func @transform_1(%arg0: i32) -> (i32, i32) {
    %c0_i32 = arith.constant 0 : i32
    %c0_i32_0 = arith.constant 0 : i32
    %c0_i32_1 = arith.constant 0 : i32
    return %c0_i32, %c0_i32_0 : i32, i32
  }
  func.func @transform_2(%arg0: i32) -> (i32, i32) {
    %c0_i32 = arith.constant 0 : i32
    %c0_i32_0 = arith.constant 0 : i32
    %c0_i32_1 = arith.constant 0 : i32
    return %c0_i32, %c0_i32_0 : i32, i32
  }
  func.func @transform_3(%arg0: i32) -> (i32, i32) {
    %c0_i32 = arith.constant 0 : i32
    %c0_i32_0 = arith.constant 0 : i32
    %c0_i32_1 = arith.constant 0 : i32
    return %c0_i32, %c0_i32_0 : i32, i32
  }
  func.func @transform_4(%arg0: i32) -> (i32, i32) {
    %c0_i32 = arith.constant 0 : i32
    %c0_i32_0 = arith.constant 0 : i32
    %c0_i32_1 = arith.constant 0 : i32
    return %c0_i32, %c0_i32_0 : i32, i32
  }
  func.func @transform_5(%arg0: i32) -> (i32, i32) {
    %c0_i32 = arith.constant 0 : i32
    %c0_i32_0 = arith.constant 0 : i32
    %c0_i32_1 = arith.constant 0 : i32
    return %c0_i32, %c0_i32_0 : i32, i32
  }
  func.func @transform_6(%arg0: i32) -> (i32, i32) {
    %c0_i32 = arith.constant 0 : i32
    %c0_i32_0 = arith.constant 0 : i32
    %c0_i32_1 = arith.constant 0 : i32
    return %c0_i32, %c0_i32_0 : i32, i32
  }
  func.func @transform_7(%arg0: i32) -> (i32, i32, i32) {
    %c0_i32 = arith.constant 0 : i32
    %c0_i32_0 = arith.constant 0 : i32
    %c0_i32_1 = arith.constant 0 : i32
    return %arg0, %c0_i32, %c0_i32_0 : i32, i32, i32
  }
}

</mosaic_0001>

<llo_original>
// kernel: tpu_custom_call.1
$region0: #{tpu_custom_call.1}
  #allocation0 [shape = 'u32[]', space=smem, size = 0x4, offset = 0x4, fixed_abs, tag = 'smem constant byte address 0x4 - core index']
  #allocation1 [shape = 'u32[72,128]{1,0:T(1,128)}', space=vmem, size = 0x9000, scoped, tag = 'internal scratch']
  #allocation2 [shape = 'f32[1,1]{1,0:T(1,128)S(6)}', space=smem, size = 0x200, scoped, tag = 'scoped memory for tpu_custom_call.1']
  %s0 = inlined_call_operand.hbm [shape: f32[2,32,256], index: 0, kind: input, shape index: {}]
  %s1 = inlined_call_operand.vmem [shape: f32[2,32], index: 1, kind: input, shape index: {}]
  %s2 = inlined_call_operand.vmem [shape: f32[2,1], index: 2, kind: input, shape index: {}]
  %s3 = inlined_call_operand.vmem [shape: f32[32,2], index: 3, kind: input, shape index: {}]
  %s4 = inlined_call_operand.vmem [shape: f32[32,1], index: 4, kind: input, shape index: {}]
  %s5 = inlined_call_operand.vmem [shape: f32[1,32], index: 5, kind: input, shape index: {}]
  %s6 = inlined_call_operand.<no memory space> [shape: f32[1,1], index: 6, kind: input, shape index: {}]
  %s7 = inlined_call_operand.hbm [shape: f32[2,32,256], index: 7, kind: output, shape index: {}]
  %s8 = sld [smem:[#allocation0]]
  $region65: #{tpu_custom_call.1} parent=0
    _
  %s10 = ssub.s32 1, %s8
  %s11 = scalar_select 0, %s10, %s8
  %12 = sst [smem:[#allocation2]] %s6
  $region1: #{tpu_custom_call.1} parent=0
    #allocation3 [shape = 'u8[65536]{0}', space=vmem, size = 0x10000, scoped, tag = 'input window, operand 0']
    #allocation4 [shape = 's32[2]{0}', space=sflag, size = 0x8, scoped, tag = 'scoped memory for tpu_custom_call.1']
    #allocation5 [shape = 's32[2]{0}', space=sflag, size = 0x8, scoped, tag = 'scoped memory for tpu_custom_call.1']
    #allocation6 [shape = 'u8[65536]{0}', space=vmem, size = 0x10000, scoped, tag = 'output window, operand 0']
    %13 = vsyncpa [#allocation4], 0
    %s14 = scalar_lea.sflag [#allocation4], 1
    %15 = vsyncpa %s14, 0
    %16 = vsyncpa [#allocation5], 0
    %s17 = scalar_lea.sflag [#allocation5], 1
    %18 = vsyncpa %s17, 0
    loop: start=0, step=1, limit=4
    $region2: #{tpu_custom_call.1} parent=1 // loop_pre_header
      _
    $region3: #{tpu_custom_call.1} parent=1 // loop_header
      %s20 = sphi 0, %s24
      %p21 = scmp.ge.s32.totalorder %s20, 4
      %s30 = sphi 0, %s32
      %s33 = sphi 0, %s30
      %s34 = sphi 0, %s33
      %s50 = sphi 0, %s34
      %s54 = sphi 0, %s54
      %s56 = sphi 0, %s54
      %s57 = sphi 0, %s56
      %s71 = sphi 0, %s57
      %s75 = sphi 0, %s75
      %s77 = sphi 0, %s75
      %s78 = sphi 0, %s77
      %s92 = sphi 0, %s78
      %s96 = sphi 0, %s96
      %s98 = sphi 0, %s96
      %s99 = sphi 0, %s98
      %s113 = sphi 0, %s99
      %s117 = sphi 0, %s117
      %s119 = sphi 0, %s117
      %s120 = sphi 0, %s119
      %s134 = sphi 0, %s120
      %s138 = sphi 0, %s138
      %s140 = sphi 0, %s138
      %s141 = sphi 0, %s140
      %s155 = sphi 0, %s141
      %s159 = sphi 0, %s159
      %s161 = sphi 0, %s159
      %s162 = sphi 0, %s161
      %s176 = sphi 0, %s162
      %s182 = sphi 0, %s184
      %s185 = sphi 0, %s182
      %s186 = sphi 0, %s185
      %s202 = sphi 0, %s186
    $region4: #{tpu_custom_call.1} parent=1 // loop_header_branch
      %23 = sbr.rel (%p21) target = $region8
    $region5: #{tpu_custom_call.1} parent=1 // loop_body
      %s25 = ssub.s32 %s20, 1
      %s26 = ssub.s32 %s20, 2
      %s27 = sadd.s32 %s20, 1
      %s28 = ssub.s32 %s20, %s27
      %p29 = scmp.eq.s32.totalorder %s28, 0
      %s31 = sadd.s32 %s30, 1
      %s32 = scalar_select %p29, %s30, %s31
      %p35 = pneg %p29
      %p36 = scmp.eq.s32.totalorder %s20, 1
      %p37 = por %p35, %p36
      %p38 = scmp.ne.s32.totalorder %s30, %s33
      %p39 = scmp.eq.s32.totalorder %s20, 0
      %p40 = por %p38, %p39
      %p41 = scmp.ne.s32.totalorder %s30, %s33
      %p42 = scmp.eq.s32.totalorder %s25, 1
      %p43 = por %p41, %p42
      %p44 = scmp.ne.s32.totalorder %s33, %s34
      %p45 = scmp.eq.s32.totalorder %s25, 0
      %p46 = por %p44, %p45
      %p47 = scmp.ne.s32.totalorder %s33, %s34
      %p48 = scmp.eq.s32.totalorder %s26, 1
      %p49 = por %p47, %p48
      %p51 = scmp.ne.s32.totalorder %s34, %s50
      %p52 = scmp.eq.s32.totalorder %s26, 0
      %p53 = por %p51, %p52
      %s55 = sadd.s32 %s54, 1
      %p58 = scmp.eq.s32.totalorder %s20, 1
      %p59 = scmp.ne.s32.totalorder %s54, %s56
      %p60 = scmp.eq.s32.totalorder %s20, 0
      %p61 = por %p59, %p60
      %p62 = scmp.ne.s32.totalorder %s54, %s56
      %p63 = scmp.eq.s32.totalorder %s25, 1
      %p64 = por %p62, %p63
      %p65 = scmp.ne.s32.totalorder %s56, %s57
      %p66 = scmp.eq.s32.totalorder %s25, 0
      %p67 = por %p65, %p66
      %p68 = scmp.ne.s32.totalorder %s56, %s57
      %p69 = scmp.eq.s32.totalorder %s26, 1
      %p70 = por %p68, %p69
      %p72 = scmp.ne.s32.totalorder %s57, %s71
      %p73 = scmp.eq.s32.totalorder %s26, 0
      %p74 = por %p72, %p73
      %s76 = sadd.s32 %s75, 1
      %p79 = scmp.eq.s32.totalorder %s20, 1
      %p80 = scmp.ne.s32.totalorder %s75, %s77
      %p81 = scmp.eq.s32.totalorder %s20, 0
      %p82 = por %p80, %p81
      %p83 = scmp.ne.s32.totalorder %s75, %s77
      %p84 = scmp.eq.s32.totalorder %s25, 1
      %p85 = por %p83, %p84
      %p86 = scmp.ne.s32.totalorder %s77, %s78
      %p87 = scmp.eq.s32.totalorder %s25, 0
      %p88 = por %p86, %p87
      %p89 = scmp.ne.s32.totalorder %s77, %s78
      %p90 = scmp.eq.s32.totalorder %s26, 1
      %p91 = por %p89, %p90
      %p93 = scmp.ne.s32.totalorder %s78, %s92
      %p94 = scmp.eq.s32.totalorder %s26, 0
      %p95 = por %p93, %p94
      %s97 = sadd.s32 %s96, 1
      %p100 = scmp.eq.s32.totalorder %s20, 1
      %p101 = scmp.ne.s32.totalorder %s96, %s98
      %p102 = scmp.eq.s32.totalorder %s20, 0
      %p103 = por %p101, %p102
      %p104 = scmp.ne.s32.totalorder %s96, %s98
      %p105 = scmp.eq.s32.totalorder %s25, 1
      %p106 = por %p104, %p105
      %p107 = scmp.ne.s32.totalorder %s98, %s99
      %p108 = scmp.eq.s32.totalorder %s25, 0
      %p109 = por %p107, %p108
      %p110 = scmp.ne.s32.totalorder %s98, %s99
      %p111 = scmp.eq.s32.totalorder %s26, 1
      %p112 = por %p110, %p111
      %p114 = scmp.ne.s32.totalorder %s99, %s113
      %p115 = scmp.eq.s32.totalorder %s26, 0
      %p116 = por %p114, %p115
      %s118 = sadd.s32 %s117, 1
      %p121 = scmp.eq.s32.totalorder %s20, 1
      %p122 = scmp.ne.s32.totalorder %s117, %s119
      %p123 = scmp.eq.s32.totalorder %s20, 0
      %p124 = por %p122, %p123
      %p125 = scmp.ne.s32.totalorder %s117, %s119
      %p126 = scmp.eq.s32.totalorder %s25, 1
      %p127 = por %p125, %p126
      %p128 = scmp.ne.s32.totalorder %s119, %s120
      %p129 = scmp.eq.s32.totalorder %s25, 0
      %p130 = por %p128, %p129
      %p131 = scmp.ne.s32.totalorder %s119, %s120
      %p132 = scmp.eq.s32.totalorder %s26, 1
      %p133 = por %p131, %p132
      %p135 = scmp.ne.s32.totalorder %s120, %s134
      %p136 = scmp.eq.s32.totalorder %s26, 0
      %p137 = por %p135, %p136
      %s139 = sadd.s32 %s138, 1
      %p142 = scmp.eq.s32.totalorder %s20, 1
      %p143 = scmp.ne.s32.totalorder %s138, %s140
      %p144 = scmp.eq.s32.totalorder %s20, 0
      %p145 = por %p143, %p144
      %p146 = scmp.ne.s32.totalorder %s138, %s140
      %p147 = scmp.eq.s32.totalorder %s25, 1
      %p148 = por %p146, %p147
      %p149 = scmp.ne.s32.totalorder %s140, %s141
      %p150 = scmp.eq.s32.totalorder %s25, 0
      %p151 = por %p149, %p150
      %p152 = scmp.ne.s32.totalorder %s140, %s141
      %p153 = scmp.eq.s32.totalorder %s26, 1
      %p154 = por %p152, %p153
      %p156 = scmp.ne.s32.totalorder %s141, %s155
      %p157 = scmp.eq.s32.totalorder %s26, 0
      %p158 = por %p156, %p157
      %s160 = sadd.s32 %s159, 1
      %p163 = scmp.eq.s32.totalorder %s20, 1
      %p164 = scmp.ne.s32.totalorder %s159, %s161
      %p165 = scmp.eq.s32.totalorder %s20, 0
      %p166 = por %p164, %p165
      %p167 = scmp.ne.s32.totalorder %s159, %s161
      %p168 = scmp.eq.s32.totalorder %s25, 1
      %p169 = por %p167, %p168
      %p170 = scmp.ne.s32.totalorder %s161, %s162
      %p171 = scmp.eq.s32.totalorder %s25, 0
      %p172 = por %p170, %p171
      %p173 = scmp.ne.s32.totalorder %s161, %s162
      %p174 = scmp.eq.s32.totalorder %s26, 1
      %p175 = por %p173, %p174
      %p177 = scmp.ne.s32.totalorder %s162, %s176
      %p178 = scmp.eq.s32.totalorder %s26, 0
      %p179 = por %p177, %p178
      %s180 = ssub.s32 %s20, %s27
      %p181 = scmp.eq.s32.totalorder %s180, 0
      %s183 = sadd.s32 %s182, 1
      %s184 = scalar_select %p181, %s182, %s183
      %p187 = pneg %p181
      %p188 = scmp.eq.s32.totalorder %s20, 1
      %p189 = por %p187, %p188
      %p190 = scmp.ne.s32.totalorder %s182, %s185
      %p191 = scmp.eq.s32.totalorder %s20, 0
      %p192 = por %p190, %p191
      %p193 = scmp.ne.s32.totalorder %s182, %s185
      %p194 = scmp.eq.s32.totalorder %s25, 1
      %p195 = por %p193, %p194
      %p196 = scmp.ne.s32.totalorder %s185, %s186
      %p197 = scmp.eq.s32.totalorder %s25, 0
      %p198 = por %p196, %p197
      %p199 = scmp.ne.s32.totalorder %s185, %s186
      %p200 = scmp.eq.s32.totalorder %s26, 1
      %p201 = por %p199, %p200
      %p203 = scmp.ne.s32.totalorder %s186, %s202
      %p204 = scmp.eq.s32.totalorder %s26, 0
      %p205 = por %p203, %p204
      %p206 = scmp.le.s32.totalorder 1, %s20
      %p207 = scmp.lt.s32.totalorder %s20, 3
      %p208 = pnand %p206, %p207
      %p209 = pneg %p208
      // Predicated region
      $region9: #{tpu_custom_call.1} parent=5 // pred_check
        _
      $region10: #{tpu_custom_call.1} parent=5 // pred_check_branch
        %211 = sbr.rel (%p208) target = $region12
      $region11: #{tpu_custom_call.1} parent=5 // pred_region
        %s212 = ssub.s32 %s20, 1
        // Predicated region
        $region13: #{tpu_custom_call.1} parent=11 // pred_check
          %p213 = pneg %p67
        $region14: #{tpu_custom_call.1} parent=11 // pred_check_branch
          %215 = sbr.rel (%p213) target = $region16
        $region15: #{tpu_custom_call.1} parent=11 // pred_region
          _
        $region16: #{tpu_custom_call.1} parent=11 // pred_fallthru
          _
        // Predicated region
        $region17: #{tpu_custom_call.1} parent=11 // pred_check
          %p216 = pneg %p88
        $region18: #{tpu_custom_call.1} parent=11 // pred_check_branch
          %218 = sbr.rel (%p216) target = $region20
        $region19: #{tpu_custom_call.1} parent=11 // pred_region
          _
        $region20: #{tpu_custom_call.1} parent=11 // pred_fallthru
          _
        // Predicated region
        $region21: #{tpu_custom_call.1} parent=11 // pred_check
          %p219 = pneg %p109
        $region22: #{tpu_custom_call.1} parent=11 // pred_check_branch
          %221 = sbr.rel (%p219) target = $region24
        $region23: #{tpu_custom_call.1} parent=11 // pred_region
          _
        $region24: #{tpu_custom_call.1} parent=11 // pred_fallthru
          _
        // Predicated region
        $region25: #{tpu_custom_call.1} parent=11 // pred_check
          %p222 = pneg %p130
        $region26: #{tpu_custom_call.1} parent=11 // pred_check_branch
          %224 = sbr.rel (%p222) target = $region28
        $region27: #{tpu_custom_call.1} parent=11 // pred_region
          _
        $region28: #{tpu_custom_call.1} parent=11 // pred_fallthru
          _
        // Predicated region
        $region29: #{tpu_custom_call.1} parent=11 // pred_check
          %p225 = pneg %p151
        $region30: #{tpu_custom_call.1} parent=11 // pred_check_branch
          %227 = sbr.rel (%p225) target = $region32
        $region31: #{tpu_custom_call.1} parent=11 // pred_region
          _
        $region32: #{tpu_custom_call.1} parent=11 // pred_fallthru
          _
        // Predicated region
        $region33: #{tpu_custom_call.1} parent=11 // pred_check
          %p228 = pneg %p172
        $region34: #{tpu_custom_call.1} parent=11 // pred_check_branch
          %230 = sbr.rel (%p228) target = $region36
        $region35: #{tpu_custom_call.1} parent=11 // pred_region
          _
        $region36: #{tpu_custom_call.1} parent=11 // pred_fallthru
          _
      $region12: #{tpu_custom_call.1} parent=5 // pred_fallthru
        _
      %p231 = scmp.lt.s32.totalorder %s20, 2
      // Predicated region
      $region37: #{tpu_custom_call.1} parent=5 // pred_check
        %p232 = pneg %p231
      $region38: #{tpu_custom_call.1} parent=5 // pred_check_branch
        %234 = sbr.rel (%p232) target = $region40
      $region39: #{tpu_custom_call.1} parent=5 // pred_region
        // Predicated region
        $region41: #{tpu_custom_call.1} parent=39 // pred_check
          %p235 = pneg %p40
        $region42: #{tpu_custom_call.1} parent=39 // pred_check_branch
          %237 = sbr.rel (%p235) target = $region44
        $region43: #{tpu_custom_call.1} parent=39 // pred_region
          %s238 = sand.u32 %s30, 1
          %s239 = scalar_lea.sflag [#allocation4], %s238
          %s240 = sand.u32 %s30, 1
          %s241 = smul.addr %s240, 64
          %s242 = scalar_lea.vmem [#allocation3], %s241
          %244 = vsyncadd %s239, 0
          %s245 = smul.addr %s20, 8
          %s246 = smul.addr %s245, 8
          %s247 = scalar_lea.hbm %s0, %s246
          %s248 = sshll.u32 %s247, 4
          %s249 = int_to_ptr.hbm [resolvable:$true] %s248
          %s250 = sshll.u32 %s242, 4
          %s251 = int_to_ptr.vmem [resolvable:$true] %s250
          %256 = dma.hbm_to_vmem [thread:$0]  %s249, 1024, %s251, %s239, 256, 256, 16
        $region44: #{tpu_custom_call.1} parent=39 // pred_fallthru
          _
      $region40: #{tpu_custom_call.1} parent=5 // pred_fallthru
        _
      %p257 = scmp.le.s32.totalorder 1, %s20
      %p258 = scmp.lt.s32.totalorder %s20, 3
      %p259 = pnand %p257, %p258
      %p260 = pneg %p259
      // Predicated region
      $region45: #{tpu_custom_call.1} parent=5 // pred_check
        _
      $region46: #{tpu_custom_call.1} parent=5 // pred_check_branch
        %262 = sbr.rel (%p259) target = $region48
      $region47: #{tpu_custom_call.1} parent=5 // pred_region
        %s263 = ssub.s32 %s20, 1
        %s264 = sand.u32 %s33, 1
        %s265 = scalar_lea.sflag [#allocation4], %s264
        %s266 = sand.u32 %s33, 1
        %s267 = smul.addr %s266, 64
        %s268 = scalar_lea.vmem [#allocation3], %s267
        // Predicated region
        $region49: #{tpu_custom_call.1} parent=47 // pred_check
          %p269 = pneg %p46
        $region50: #{tpu_custom_call.1} parent=47 // pred_check_branch
          %271 = sbr.rel (%p269) target = $region52
        $region51: #{tpu_custom_call.1} parent=47 // pred_region
          %273 = dma.done %s265, 1024
        $region52: #{tpu_custom_call.1} parent=47 // pred_fallthru
          _
        %s274 = sand.u32 %s33, 1
        %s275 = scalar_lea.sflag [#allocation4], %s274
        %s276 = sand.u32 %s33, 1
        %s277 = smul.addr %s276, 64
        %s278 = scalar_lea.vmem [#allocation3], %s277
        %p279 = pneg %p46
        %p280 = pneg %p43
        %p281 = pneg %p67
        %p282 = pneg %p64
        %p283 = pneg %p88
        %p284 = pneg %p85
        %p285 = pneg %p109
        %p286 = pneg %p106
        %p287 = pneg %p130
        %p288 = pneg %p127
        %p289 = pneg %p151
        %p290 = pneg %p148
        %p291 = pneg %p172
        %p292 = pneg %p169
        %p293 = pneg %p198
        %p294 = pneg %p195
        %s295 = sand.u32 %s185, 1
        %s296 = scalar_lea.sflag [#allocation5], %s295
        %s297 = sand.u32 %s185, 1
        %s298 = smul.addr %s297, 64
        %s299 = scalar_lea.vmem [#allocation6], %s298
        %v300 = vld [vmem:[%s268] sm:$0xff]
        %v301 = vld [vmem:[%s268 + $0x8] sm:$0xff]
        %v302 = vld [vmem:[%s268 + $0x10] sm:$0xff]
        %v303 = vld [vmem:[%s268 + $0x18] sm:$0xff]
        %v304 = vld [vmem:[%s268 + $0x20] sm:$0xff]
        %v305 = vld [vmem:[%s268 + $0x28] sm:$0xff]
        %v306 = vld [vmem:[%s268 + $0x30] sm:$0xff]
        %v307 = vld [vmem:[%s268 + $0x38] sm:$0xff]
        %v308 = vadd.f32 %v300, %v301
        %309 = vadd.xlane.f32.xlu0 %v308
        %v310 = vpop.xlane.xlu0 %309
        %v311 = vadd.f32 %v302, %v303
        %312 = vadd.xlane.f32.xlu0 %v311
        %v313 = vpop.xlane.xlu0 %312
        %v314 = vadd.f32 %v304, %v305
        %315 = vadd.xlane.f32.xlu0 %v314
        %v316 = vpop.xlane.xlu0 %315
        %v317 = vadd.f32 %v306, %v307
        %318 = vadd.xlane.f32.xlu0 %v317
        %v319 = vpop.xlane.xlu0 %318
        %v320 = vmul.f32 %v310, 0.00390625
        %v321 = vmul.f32 %v313, 0.00390625
        %v322 = vmul.f32 %v316, 0.00390625
        %v323 = vmul.f32 %v319, 0.00390625
        %v324 = vld [vmem:[%s1] sm:$0x3]
        %v325 = vld [vmem:[%s2] sm:$0x3]
        %vm326 = vcmask 261120
        %v328 = vsel %vm326, %v324, 0
        %330 = vmatpush.msra.mxu0 0.0
        %331 = vmatpush.msra.mxu0 0.0
        %332 = vmatpush.msra.mxu0 0.0
        %333 = vmatpush.msra.mxu0 0.0
        %334 = vmatpush.msra.mxu0 0.0
        %335 = vmatpush.msra.mxu0 0.0
        %336 = vmatpush.msra.mxu0 0.0
        %337 = vmatpush.msra.mxu0 0.0
        %338 = vmatpush.msra.mxu0 0.0
        %339 = vmatpush.msra.mxu0 0.0
        %340 = vmatpush.msra.mxu0 0.0
        %341 = vmatpush.msra.mxu0 0.0
        %342 = vmatpush.msra.mxu0 %v323
        %343 = vmatpush.msra.mxu0 %v322
        %344 = vmatpush.msra.mxu0 %v321
        %345 = vmatpush.msra.mxu0 %v320
        %346 = vmatmul.f32.gmra.mxu0 %v328
        %v347 = vpop.f32.mrf.mxu0
        %v348 = vadd.f32 %v325, %v347
        %349 = vdwg.mxu0
        %v350 = vmax.f32 %v348, 0.0
        %v351 = vld [vmem:[%s3] sm:$0xff]
        %v352 = vld [vmem:[%s3 + $0x8] sm:$0xff]
        %v353 = vld [vmem:[%s3 + $0x10] sm:$0xff]
        %v354 = vld [vmem:[%s3 + $0x18] sm:$0xff]
        %v355 = vld [vmem:[%s4] sm:$0xff]
        %v356 = vld [vmem:[%s4 + $0x8] sm:$0xff]
        %v357 = vld [vmem:[%s4 + $0x10] sm:$0xff]
        %v358 = vld [vmem:[%s4 + $0x18] sm:$0xff]
        %vm359 = vcmask 15360
        %v361 = vsel %vm359, %v351, 0
        %v364 = vsel %vm359, %v352, 0
        %v367 = vsel %vm359, %v353, 0
        %v370 = vsel %vm359, %v354, 0
        %vm372 = vcmask 1041408
        %v374 = vsel %vm372, %v350, 0
        %376 = vmatpush.msra.mxu0 0.0
        %377 = vmatpush.msra.mxu0 0.0
        %378 = vmatpush.msra.mxu0 0.0
        %379 = vmatpush.msra.mxu0 0.0
        %380 = vmatpush.msra.mxu0 0.0
        %381 = vmatpush.msra.mxu0 0.0
        %382 = vmatpush.msra.mxu0 0.0
        %383 = vmatpush.msra.mxu0 0.0
        %384 = vmatpush.msra.mxu0 0.0
        %385 = vmatpush.msra.mxu0 0.0
        %386 = vmatpush.msra.mxu0 0.0
        %387 = vmatpush.msra.mxu0 0.0
        %388 = vmatpush.msra.mxu0 0.0
        %389 = vmatpush.msra.mxu0 0.0
        %390 = vmatpush.msra.mxu0 0.0
        %391 = vmatpush.msra.mxu0 %v374
        %392 = vmatmul.f32.gmra.mxu0 %v361
        %v393 = vpop.f32.mrf.mxu0
        %v394 = vadd.f32 %v355, %v393
        %395 = vmatmul.f32.gmra.mxu0 %v364
        %v396 = vpop.f32.mrf.mxu0
        %v397 = vadd.f32 %v356, %v396
        %398 = vmatmul.f32.gmra.mxu0 %v367
        %v399 = vpop.f32.mrf.mxu0
        %v400 = vadd.f32 %v357, %v399
        %401 = vmatmul.f32.gmra.mxu0 %v370
        %v402 = vpop.f32.mrf.mxu0
        %v403 = vadd.f32 %v358, %v402
        %404 = vdwg.mxu0
        %v405 = vxor.u32 %v394, 2147483648
        %v406 = vxor.u32 %v397, 2147483648
        %v407 = vxor.u32 %v400, 2147483648
        %v408 = vxor.u32 %v403, 2147483648
        %v409 = vmul.f32 %v405, 1.442695
        %v410 = vpow.pop %v409
        %v411 = vmul.f32 %v406, 1.442695
        %v412 = vpow.pop %v411
        %v413 = vmul.f32 %v407, 1.442695
        %v414 = vpow.pop %v413
        %v415 = vmul.f32 %v408, 1.442695
        %v416 = vpow.pop %v415
        %v417 = vadd.f32 %v410, 1.0
        %v418 = vadd.f32 %v412, 1.0
        %v419 = vadd.f32 %v414, 1.0
        %v420 = vadd.f32 %v416, 1.0
        %v421 = vrcp.pop %v417
        %v422 = vmul.f32 %v417, %v421
        %v423 = vsub.f32 1.0, %v422
        %v424 = vmul.f32 %v421, %v423
        %v425 = vadd.f32 %v421, %v424
        %vm426 = vweird.f32 %v417
        %vm427 = vweird.f32 %v421
        %vm428 = vmor %vm426, %vm427
        %v429 = vsel %vm428, %v421, %v425
        %v430 = vand.u32 2147483647, %v417
        %vm431 = vcmp.eq.f32.partialorder %v430, 8.507059e+37
        %v432 = vand.u32 %v417, 2147483648
        %v433 = vor.u32 1.1754944e-38, %v432
        %v434 = vsel %vm431, %v433, %v429
        %v435 = vmul.f32 1.0, %v434
        %v436 = vrcp.pop %v418
        %v437 = vmul.f32 %v418, %v436
        %v438 = vsub.f32 1.0, %v437
        %v439 = vmul.f32 %v436, %v438
        %v440 = vadd.f32 %v436, %v439
        %vm441 = vweird.f32 %v418
        %vm442 = vweird.f32 %v436
        %vm443 = vmor %vm441, %vm442
        %v444 = vsel %vm443, %v436, %v440
        %v445 = vand.u32 2147483647, %v418
        %vm446 = vcmp.eq.f32.partialorder %v445, 8.507059e+37
        %v447 = vand.u32 %v418, 2147483648
        %v448 = vor.u32 1.1754944e-38, %v447
        %v449 = vsel %vm446, %v448, %v444
        %v450 = vmul.f32 1.0, %v449
        %v451 = vrcp.pop %v419
        %v452 = vmul.f32 %v419, %v451
        %v453 = vsub.f32 1.0, %v452
        %v454 = vmul.f32 %v451, %v453
        %v455 = vadd.f32 %v451, %v454
        %vm456 = vweird.f32 %v419
        %vm457 = vweird.f32 %v451
        %vm458 = vmor %vm456, %vm457
        %v459 = vsel %vm458, %v451, %v455
        %v460 = vand.u32 2147483647, %v419
        %vm461 = vcmp.eq.f32.partialorder %v460, 8.507059e+37
        %v462 = vand.u32 %v419, 2147483648
        %v463 = vor.u32 1.1754944e-38, %v462
        %v464 = vsel %vm461, %v463, %v459
        %v465 = vmul.f32 1.0, %v464
        %v466 = vrcp.pop %v420
        %v467 = vmul.f32 %v420, %v466
        %v468 = vsub.f32 1.0, %v467
        %v469 = vmul.f32 %v466, %v468
        %v470 = vadd.f32 %v466, %v469
        %vm471 = vweird.f32 %v420
        %vm472 = vweird.f32 %v466
        %vm473 = vmor %vm471, %vm472
        %v474 = vsel %vm473, %v466, %v470
        %v475 = vand.u32 2147483647, %v420
        %vm476 = vcmp.eq.f32.partialorder %v475, 8.507059e+37
        %v477 = vand.u32 %v420, 2147483648
        %v478 = vor.u32 1.1754944e-38, %v477
        %v479 = vsel %vm476, %v478, %v474
        %v480 = vmul.f32 1.0, %v479
        %v481 = vld [vmem:[%s5] sm:$0x1]
        %s482 = sld [smem:[#allocation2]]
        %v483 = vstv %s482
        %v485 = vsel %vm326, %v481, 0
        %487 = vmatpush.msra.mxu0 0.0
        %488 = vmatpush.msra.mxu0 0.0
        %489 = vmatpush.msra.mxu0 0.0
        %490 = vmatpush.msra.mxu0 0.0
        %491 = vmatpush.msra.mxu0 0.0
        %492 = vmatpush.msra.mxu0 0.0
        %493 = vmatpush.msra.mxu0 0.0
        %494 = vmatpush.msra.mxu0 0.0
        %495 = vmatpush.msra.mxu0 0.0
        %496 = vmatpush.msra.mxu0 0.0
        %497 = vmatpush.msra.mxu0 0.0
        %498 = vmatpush.msra.mxu0 0.0
        %499 = vmatpush.msra.mxu0 %v306
        %500 = vmatpush.msra.mxu0 %v304
        %501 = vmatpush.msra.mxu0 %v302
        %502 = vmatpush.msra.mxu0 %v300
        %503 = vmatmul.f32.gmra.mxu0 %v485
        %v504 = vpop.f32.mrf.mxu0
        %v505 = vadd.f32 %v483, %v504
        %506 = vdwg.mxu0
        %507 = vmatpush.msra.mxu0 0.0
        %508 = vmatpush.msra.mxu0 0.0
        %509 = vmatpush.msra.mxu0 0.0
        %510 = vmatpush.msra.mxu0 0.0
        %511 = vmatpush.msra.mxu0 0.0
        %512 = vmatpush.msra.mxu0 0.0
        %513 = vmatpush.msra.mxu0 0.0
        %514 = vmatpush.msra.mxu0 0.0
        %515 = vmatpush.msra.mxu0 0.0
        %516 = vmatpush.msra.mxu0 0.0
        %517 = vmatpush.msra.mxu0 0.0
        %518 = vmatpush.msra.mxu0 0.0
        %519 = vmatpush.msra.mxu0 %v307
        %520 = vmatpush.msra.mxu0 %v305
        %521 = vmatpush.msra.mxu0 %v303
        %522 = vmatpush.msra.mxu0 %v301
        %523 = vmatmul.f32.gmra.mxu0 %v485
        %v524 = vpop.f32.mrf.mxu0
        %v525 = vadd.f32 %v483, %v524
        %526 = vdwg.mxu0
        %v527 = vxor.u32 %v505, 2147483648
        %v528 = vxor.u32 %v525, 2147483648
        %v529 = vmul.f32 %v527, 1.442695
        %v530 = vpow.pop %v529
        %v531 = vmul.f32 %v528, 1.442695
        %v532 = vpow.pop %v531
        %v533 = vadd.f32 %v530, 1.0
        %v534 = vadd.f32 %v532, 1.0
        %v535 = vrcp.pop %v533
        %v536 = vmul.f32 %v533, %v535
        %v537 = vsub.f32 1.0, %v536
        %v538 = vmul.f32 %v535, %v537
        %v539 = vadd.f32 %v535, %v538
        %vm540 = vweird.f32 %v533
        %vm541 = vweird.f32 %v535
        %vm542 = vmor %vm540, %vm541
        %v543 = vsel %vm542, %v535, %v539
        %v544 = vand.u32 2147483647, %v533
        %vm545 = vcmp.eq.f32.partialorder %v544, 8.507059e+37
        %v546 = vand.u32 %v533, 2147483648
        %v547 = vor.u32 1.1754944e-38, %v546
        %v548 = vsel %vm545, %v547, %v543
        %v549 = vmul.f32 1.0, %v548
        %v550 = vrcp.pop %v534
        %v551 = vmul.f32 %v534, %v550
        %v552 = vsub.f32 1.0, %v551
        %v553 = vmul.f32 %v550, %v552
        %v554 = vadd.f32 %v550, %v553
        %vm555 = vweird.f32 %v534
        %vm556 = vweird.f32 %v550
        %vm557 = vmor %vm555, %vm556
        %v558 = vsel %vm557, %v550, %v554
        %v559 = vand.u32 2147483647, %v534
        %vm560 = vcmp.eq.f32.partialorder %v559, 8.507059e+37
        %v561 = vand.u32 %v534, 2147483648
        %v562 = vor.u32 1.1754944e-38, %v561
        %v563 = vsel %vm560, %v562, %v558
        %v564 = vmul.f32 1.0, %v563
        %566 = vset.pattern.permute.xlu0 0
        %567 = vperm.xlu0 %566, %v435
        %v568 = vpop.permute.xlu0 %567
        %571 = vset.pattern.permute.xlu0 0
        %572 = vperm.xlu0 %571, %v450
        %v573 = vpop.permute.xlu0 %572
        %576 = vset.pattern.permute.xlu0 0
        %577 = vperm.xlu0 %576, %v465
        %v578 = vpop.permute.xlu0 %577
        %581 = vset.pattern.permute.xlu0 0
        %582 = vperm.xlu0 %581, %v480
        %v583 = vpop.permute.xlu0 %582
        %v585 = vperm.slane %v549, 0
        %v586 = vperm.slane %v564, 0
        %v587 = vadd.f32 %v568, %v585
        %v588 = vadd.f32 %v568, %v586
        %v589 = vadd.f32 %v573, %v585
        %v590 = vadd.f32 %v573, %v586
        %v591 = vadd.f32 %v578, %v585
        %v592 = vadd.f32 %v578, %v586
        %v593 = vadd.f32 %v583, %v585
        %v594 = vadd.f32 %v583, %v586
        %v595 = vmul.f32 %v300, %v587
        %v596 = vmul.f32 %v301, %v588
        %v597 = vmul.f32 %v302, %v589
        %v598 = vmul.f32 %v303, %v590
        %v599 = vmul.f32 %v304, %v591
        %v600 = vmul.f32 %v305, %v592
        %v601 = vmul.f32 %v306, %v593
        %v602 = vmul.f32 %v307, %v594
        %603 = vst [vmem:[%s299] sm:$0xff] %v595
        %604 = vst [vmem:[%s299 + $0x8] sm:$0xff] %v596
        %605 = vst [vmem:[%s299 + $0x10] sm:$0xff] %v597
        %606 = vst [vmem:[%s299 + $0x18] sm:$0xff] %v598
        %607 = vst [vmem:[%s299 + $0x20] sm:$0xff] %v599
        %608 = vst [vmem:[%s299 + $0x28] sm:$0xff] %v600
        %609 = vst [vmem:[%s299 + $0x30] sm:$0xff] %v601
        %610 = vst [vmem:[%s299 + $0x38] sm:$0xff] %v602
        %s611 = sand.u32 %s185, 1
        %s612 = scalar_lea.sflag [#allocation5], %s611
        %s613 = sand.u32 %s185, 1
        %s614 = smul.addr %s613, 64
        %s615 = scalar_lea.vmem [#allocation6], %s614
        // Predicated region
        $region53: #{tpu_custom_call.1} parent=47 // pred_check
          %p616 = pneg %p195
        $region54: #{tpu_custom_call.1} parent=47 // pred_check_branch
          %618 = sbr.rel (%p616) target = $region56
        $region55: #{tpu_custom_call.1} parent=47 // pred_region
          %620 = vsyncadd %s612, 0
          %s621 = smul.addr %s25, 8
          %s622 = smul.addr %s621, 8
          %s623 = scalar_lea.hbm %s7, %s622
          %s624 = sshll.u32 %s615, 4
          %s625 = int_to_ptr.vmem [resolvable:$true] %s624
          %s626 = sshll.u32 %s623, 4
          %s627 = int_to_ptr.hbm [resolvable:$true] %s626
          %632 = dma.vmem_to_hbm [thread:$0]  %s625, 1024, %s627, %s612, 256, 256, 16
        $region56: #{tpu_custom_call.1} parent=47 // pred_fallthru
          _
      $region48: #{tpu_custom_call.1} parent=5 // pred_fallthru
        _
      %p633 = scmp.le.s32.totalorder 2, %s20
      // Predicated region
      $region57: #{tpu_custom_call.1} parent=5 // pred_check
        %p634 = pneg %p633
      $region58: #{tpu_custom_call.1} parent=5 // pred_check_branch
        %636 = sbr.rel (%p634) target = $region60
      $region59: #{tpu_custom_call.1} parent=5 // pred_region
        %s637 = ssub.s32 %s20, 2
        // Predicated region
        $region61: #{tpu_custom_call.1} parent=59 // pred_check
          %p638 = pneg %p201
        $region62: #{tpu_custom_call.1} parent=59 // pred_check_branch
          %640 = sbr.rel (%p638) target = $region64
        $region63: #{tpu_custom_call.1} parent=59 // pred_region
          %s641 = sand.u32 %s186, 1
          %s642 = scalar_lea.sflag [#allocation5], %s641
          %s643 = sand.u32 %s186, 1
          %s644 = smul.addr %s643, 64
          %s645 = scalar_lea.vmem [#allocation6], %s644
          %647 = dma.done %s642, 1024
        $region64: #{tpu_custom_call.1} parent=59 // pred_fallthru
          _
      $region60: #{tpu_custom_call.1} parent=5 // pred_fallthru
        _
    $region6: #{tpu_custom_call.1} parent=1 // loop_footer
      %s24 = sadd.s32 1, %s20
    $region7: #{tpu_custom_call.1} parent=1 // loop_footer_branch
      %19 = sbr.rel target = $region3
    $region8: #{tpu_custom_call.1} parent=1 // loop_exit
      _
    %648 = vsyncpa [#allocation4], 1
    %s649 = scalar_lea.sflag [#allocation4], 1
    %650 = vsyncpa %s649, 1
    %651 = vsyncpa [#allocation5], 1
    %s652 = scalar_lea.sflag [#allocation5], 1
    %653 = vsyncpa %s652, 1

</llo_original>
